<compile_context>
chip_gen: v5e
topology: v5e:2x2
jax: 0.10.0
libtpu: 0.0.40
codegen_flags: <defaults>
</compile_context>

<pallas_src>
import jax
import jax.numpy as jnp
from jax.experimental import pallas as pl
from jax.experimental.pallas import tpu as pltpu

EPS = 1e-5


def _bn_kernel(x_ref, gamma_ref, beta_ref, o_ref):
    # x_ref: (N, c_blk, HW)   gamma_ref / beta_ref: (1, c_blk, 1)
    n, _, hw = x_ref.shape
    inv_count = 1.0 / float(n * hw)

    # Pass 1: per-channel mean (lane reduce, then batch reduce).
    x = x_ref[...].astype(jnp.float32)
    s = jnp.sum(x, axis=2, keepdims=True)          # (N, c_blk, 1)
    s = jnp.sum(s, axis=0, keepdims=True)          # (1, c_blk, 1)
    mean = s * inv_count

    # Pass 2: mean-shifted (two-pass) variance -- robust against the
    # E[x^2]-(E[x])^2 catastrophic-cancellation failure mode.  Re-read x_ref.
    c = x_ref[...].astype(jnp.float32) - mean
    ss = jnp.sum(c * c, axis=2, keepdims=True)     # (N, c_blk, 1)
    ss = jnp.sum(ss, axis=0, keepdims=True)        # (1, c_blk, 1)
    var = ss * inv_count                           # biased variance
    inv_std = jax.lax.rsqrt(var + EPS)

    # Fold affine into per-channel scale/bias -> single FMA per element.
    scale = gamma_ref[...].astype(jnp.float32) * inv_std       # (1, c_blk, 1)
    bias = beta_ref[...].astype(jnp.float32) - mean * scale    # (1, c_blk, 1)

    # Pass 3: re-read x and apply the folded FMA (no long-lived x value).
    o_ref[...] = (x_ref[...].astype(jnp.float32) * scale + bias).astype(o_ref.dtype)


def _round_up(x, m):
    return ((x + m - 1) // m) * m


def _tpu_generation_info():
    """Per-generation (num TensorCores, VMEM blocking budget, vmem_limit_bytes)."""
    kind = ""
    try:
        kind = jax.devices()[0].device_kind.lower()
    except Exception:
        pass
    if "v7" in kind or "tpu7" in kind:
        # v7x: 2 TCs/chip, only 64 MiB physical VMEM (32 MiB default scoped).
        return {"num_tc": 2, "vmem_budget": 24 << 20, "vmem_limit": 28 << 20}
    if "v5 lite" in kind or "v5e" in kind or "v5lite" in kind:
        # v5e: 1 TC, 16 MiB default scoped -> raise limit, keep one big block.
        return {"num_tc": 1, "vmem_budget": 28 << 20, "vmem_limit": 32 << 20}
    if "v6" in kind:
        # v6e: 1 TC, 128 MiB physical -> allow big blocks.
        return {"num_tc": 1, "vmem_budget": 40 << 20, "vmem_limit": 48 << 20}
    # Unknown chip: conservative defaults (fits every generation's scoped VMEM).
    return {"num_tc": 1, "vmem_budget": 14 << 20, "vmem_limit": None}


def _pick_c_block(N, C, HW, itemsize, num_tc, vmem_budget):
    """Channel block size.

    Single-TC chips: the whole C in one block whenever it fits the budget
    (extra grid steps are pure serial overhead).  Multi-TC chips (v7x) or
    over-budget shapes: an 8-aligned block with a ragged (masked) edge block,
    so grid = cdiv(C, c_blk) >= num_tc and megacore sharding applies.
    """
    hw_pad = _round_up(HW, 128)                     # lane padding of the tile
    per_c = N * hw_pad * itemsize                   # bytes per padded channel row
    # in + out, double-buffered => ~4 live copies of the block.
    max_c = max(8, (int(vmem_budget // (4 * per_c)) // 8) * 8)
    if num_tc <= 1 and C <= max_c:
        return C                                    # one block; equals full dim
    per_core = min(_round_up(pl.cdiv(C, num_tc), 8), max_c)
    if per_core >= C:
        return C
    return per_core


def batchnorm2d_pallas(x_nchw, gamma, beta):
    """BatchNorm2d forward (training-mode batch stats) via a Pallas TPU kernel.

    x_nchw: (N, C, H, W) float32;  gamma, beta: (C,) float32.
    Returns (N, C, H, W) float32.
    """
    N, C, H, W = x_nchw.shape
    HW = H * W
    itemsize = jnp.dtype(x_nchw.dtype).itemsize

    # Free, layout-preserving reshapes (no transpose, no padding copies).
    x = x_nchw.reshape(N, C, HW)
    g = gamma.reshape(1, C, 1)
    b = beta.reshape(1, C, 1)

    info = _tpu_generation_info()
    c_blk = _pick_c_block(N, C, HW, itemsize, info["num_tc"], info["vmem_budget"])
    grid = (pl.cdiv(C, c_blk),)

    # Advisory cost for the XLA scheduler (kernel is overhead-bound at 383 KB;
    # the remaining win is overlap with neighbouring ops).
    cost = pl.CostEstimate(
        flops=5 * N * C * HW,                 # mean, centered-square, FMA passes
        transcendentals=C,                    # one rsqrt per channel
        bytes_accessed=2 * N * C * HW * itemsize + 2 * C * 4,
    )

    out = pl.pallas_call(
        _bn_kernel,
        out_shape=jax.ShapeDtypeStruct((N, C, HW), x_nchw.dtype),
        grid=grid,
        in_specs=[
            pl.BlockSpec((N, c_blk, HW), lambda j: (0, j, 0)),
            pl.BlockSpec((1, c_blk, 1), lambda j: (0, j, 0)),
            pl.BlockSpec((1, c_blk, 1), lambda j: (0, j, 0)),
        ],
        out_specs=pl.BlockSpec((N, c_blk, HW), lambda j: (0, j, 0)),
        compiler_params=pltpu.CompilerParams(
            dimension_semantics=("parallel",),
            vmem_limit_bytes=info["vmem_limit"],
        ),
        cost_estimate=cost,
    )(x, g, b)

    return out.reshape(N, C, H, W)


def reference_batchnorm(x_nchw, gamma, beta):
    mean = jnp.mean(x_nchw, axis=(0, 2, 3), keepdims=True)
    var = jnp.mean((x_nchw - mean) ** 2, axis=(0, 2, 3), keepdims=True)
    xhat = (x_nchw - mean) * jax.lax.rsqrt(var + EPS)
    return xhat * gamma.reshape(1, -1, 1, 1) + beta.reshape(1, -1, 1, 1)


if __name__ == "__main__":
    key = jax.random.PRNGKey(0)
    kx, kg, kb = jax.random.split(key, 3)

    # Shape implied by the module: [1, 122, 28, 28]
    N, C, H, W = 1, 122, 28, 28
    x = jax.random.normal(kx, (N, C, H, W), dtype=jnp.float32)

    # Deterministic affine parameters (exercise the affine path).
    gamma = 1.0 + 0.1 * jax.random.normal(kg, (C,), dtype=jnp.float32)
    beta = 0.1 * jax.random.normal(kb, (C,), dtype=jnp.float32)

    out = batchnorm2d_pallas(x, gamma, beta)
    out = jax.block_until_ready(out)

    ref = reference_batchnorm(x, gamma, beta)
    assert out.shape == (N, C, H, W)
    assert jnp.allclose(out, ref, atol=1e-4, rtol=1e-4), "mismatch vs reference"

    print("KERNEL_OK")
</pallas_src>

<mosaic_0001>
module attributes {stable_mosaic.version = 11 : i64} {
  func.func @_bn_kernel(%arg0: i32, %arg1: memref<1x122x784xf32, #tpu.memory_space<vmem>>, %arg2: memref<1x122x1xf32, #tpu.memory_space<vmem>>, %arg3: memref<1x122x1xf32, #tpu.memory_space<vmem>>, %arg4: memref<1x122x784xf32, #tpu.memory_space<vmem>>) attributes {dimension_semantics = [#tpu.dimension_semantics<parallel>], iteration_bounds = array<i64: 1>, scalar_prefetch = 0 : i64, scratch_operands = 0 : i64, tpu.core_type = #tpu.core_type<tc>, window_params = [{transform_indices = @transform_0, window_bounds = array<i64: 1, 122, 784>}, {transform_indices = @transform_1, window_bounds = array<i64: 1, 122, 1>}, {transform_indices = @transform_2, window_bounds = array<i64: 1, 122, 1>}, {transform_indices = @transform_3, window_bounds = array<i64: 1, 122, 784>}]} {
    %c0 = arith.constant 0 : index
    %c0_0 = arith.constant 0 : index
    %c0_1 = arith.constant 0 : index
    %0 = vector.load %arg1[%c0, %c0_0, %c0_1] : memref<1x122x784xf32, #tpu.memory_space<vmem>>, vector<1x122x784xf32>
    %cst = arith.constant dense<0.000000e+00> : vector<1x122xf32>
    %1 = vector.multi_reduction <add>, %0, %cst [2] : vector<1x122x784xf32> to vector<1x122xf32>
    %2 = vector.shape_cast %1 : vector<1x122xf32> to vector<1x122x1xf32>
    %cst_2 = arith.constant dense<0.000000e+00> : vector<122x1xf32>
    %3 = vector.multi_reduction <add>, %2, %cst_2 [0] : vector<1x122x1xf32> to vector<122x1xf32>
    %4 = vector.shape_cast %3 : vector<122x1xf32> to vector<1x122x1xf32>
    %cst_3 = arith.constant 0.00127551018 : f32
    %5 = vector.broadcast %cst_3 : f32 to vector<1x122x1xf32>
    %6 = arith.mulf %4, %5 : vector<1x122x1xf32>
    %c0_4 = arith.constant 0 : index
    %c0_5 = arith.constant 0 : index
    %c0_6 = arith.constant 0 : index
    %7 = vector.load %arg1[%c0_4, %c0_5, %c0_6] : memref<1x122x784xf32, #tpu.memory_space<vmem>>, vector<1x122x784xf32>
    %8 = vector.broadcast %6 : vector<1x122x1xf32> to vector<1x122x784xf32>
    %9 = arith.subf %7, %8 : vector<1x122x784xf32>
    %10 = arith.mulf %9, %9 : vector<1x122x784xf32>
    %cst_7 = arith.constant dense<0.000000e+00> : vector<1x122xf32>
    %11 = vector.multi_reduction <add>, %10, %cst_7 [2] : vector<1x122x784xf32> to vector<1x122xf32>
    %12 = vector.shape_cast %11 : vector<1x122xf32> to vector<1x122x1xf32>
    %cst_8 = arith.constant dense<0.000000e+00> : vector<122x1xf32>
    %13 = vector.multi_reduction <add>, %12, %cst_8 [0] : vector<1x122x1xf32> to vector<122x1xf32>
    %14 = vector.shape_cast %13 : vector<122x1xf32> to vector<1x122x1xf32>
    %cst_9 = arith.constant 0.00127551018 : f32
    %15 = vector.broadcast %cst_9 : f32 to vector<1x122x1xf32>
    %16 = arith.mulf %14, %15 : vector<1x122x1xf32>
    %cst_10 = arith.constant 9.99999974E-6 : f32
    %17 = vector.broadcast %cst_10 : f32 to vector<1x122x1xf32>
    %18 = arith.addf %16, %17 : vector<1x122x1xf32>
    %19 = math.rsqrt %18 : vector<1x122x1xf32>
    %c0_11 = arith.constant 0 : index
    %c0_12 = arith.constant 0 : index
    %c0_13 = arith.constant 0 : index
    %20 = vector.load %arg2[%c0_11, %c0_12, %c0_13] : memref<1x122x1xf32, #tpu.memory_space<vmem>>, vector<1x122x1xf32>
    %21 = arith.mulf %20, %19 : vector<1x122x1xf32>
    %c0_14 = arith.constant 0 : index
    %c0_15 = arith.constant 0 : index
    %c0_16 = arith.constant 0 : index
    %22 = vector.load %arg3[%c0_14, %c0_15, %c0_16] : memref<1x122x1xf32, #tpu.memory_space<vmem>>, vector<1x122x1xf32>
    %23 = arith.mulf %6, %21 : vector<1x122x1xf32>
    %24 = arith.subf %22, %23 : vector<1x122x1xf32>
    %c0_17 = arith.constant 0 : index
    %c0_18 = arith.constant 0 : index
    %c0_19 = arith.constant 0 : index
    %25 = vector.load %arg1[%c0_17, %c0_18, %c0_19] : memref<1x122x784xf32, #tpu.memory_space<vmem>>, vector<1x122x784xf32>
    %26 = vector.broadcast %21 : vector<1x122x1xf32> to vector<1x122x784xf32>
    %27 = arith.mulf %25, %26 : vector<1x122x784xf32>
    %28 = vector.broadcast %24 : vector<1x122x1xf32> to vector<1x122x784xf32>
    %29 = arith.addf %27, %28 : vector<1x122x784xf32>
    %c0_20 = arith.constant 0 : index
    %c0_21 = arith.constant 0 : index
    %c0_22 = arith.constant 0 : index
    %30 = vector.load %arg4[%c0_20, %c0_21, %c0_22] : memref<1x122x784xf32, #tpu.memory_space<vmem>>, vector<1x122x784xf32>
    tpu.vector_store %arg4[%c0_20, %c0_21, %c0_22], %29 {strides = array<i32>} : memref<1x122x784xf32, #tpu.memory_space<vmem>>, vector<1x122x784xf32>,
    return
  }
  func.func @transform_0(%arg0: i32) -> (i32, i32, i32) {
    %c0_i32 = arith.constant 0 : i32
    %c0_i32_0 = arith.constant 0 : i32
    %c0_i32_1 = arith.constant 0 : i32
    return %c0_i32, %arg0, %c0_i32_0 : i32, i32, i32
  }
  func.func @transform_1(%arg0: i32) -> (i32, i32, i32) {
    %c0_i32 = arith.constant 0 : i32
    %c0_i32_0 = arith.constant 0 : i32
    %c0_i32_1 = arith.constant 0 : i32
    return %c0_i32, %arg0, %c0_i32_0 : i32, i32, i32
  }
  func.func @transform_2(%arg0: i32) -> (i32, i32, i32) {
    %c0_i32 = arith.constant 0 : i32
    %c0_i32_0 = arith.constant 0 : i32
    %c0_i32_1 = arith.constant 0 : i32
    return %c0_i32, %arg0, %c0_i32_0 : i32, i32, i32
  }
  func.func @transform_3(%arg0: i32) -> (i32, i32, i32) {
    %c0_i32 = arith.constant 0 : i32
    %c0_i32_0 = arith.constant 0 : i32
    %c0_i32_1 = arith.constant 0 : i32
    return %c0_i32, %arg0, %c0_i32_0 : i32, i32, i32
  }
}

</mosaic_0001>

<llo_original>
// kernel: tpu_custom_call.1
$region0: #{tpu_custom_call.1}
  #allocation0 [shape = 'u32[]', space=smem, size = 0x4, offset = 0x4, fixed_abs, tag = 'smem constant byte address 0x4 - core index']
  #allocation1 [shape = 'u32[72,128]{1,0:T(1,128)}', space=vmem, size = 0x9000, scoped, tag = 'internal scratch']
  %s0 = inlined_call_operand.vmem [shape: f32[1,122,784], index: 0, kind: input, shape index: {}]
  %s1 = inlined_call_operand.vmem [shape: f32[1,122,1], index: 1, kind: input, shape index: {}]
  %s2 = inlined_call_operand.vmem [shape: f32[1,122,1], index: 2, kind: input, shape index: {}]
  %s3 = inlined_call_operand.vmem [shape: f32[1,122,784], index: 3, kind: output, shape index: {}]
  %s4 = sld [smem:[#allocation0]]
  $region22: #{tpu_custom_call.1} parent=0
    _
  %s6 = ssub.s32 1, %s4
  %s7 = scalar_select 0, %s6, %s4
  // Predicated region
  $region2: #{tpu_custom_call.1} parent=0 // pred_check
    _
  $region3: #{tpu_custom_call.1} parent=0 // pred_check_branch
    %9 = sbr.rel (0) target = $region5
  $region4: #{tpu_custom_call.1} parent=0 // pred_region
    _
  $region5: #{tpu_custom_call.1} parent=0 // pred_fallthru
    _
  // Predicated region
  $region6: #{tpu_custom_call.1} parent=0 // pred_check
    _
  $region7: #{tpu_custom_call.1} parent=0 // pred_check_branch
    %11 = sbr.rel (0) target = $region9
  $region8: #{tpu_custom_call.1} parent=0 // pred_region
    _
  $region9: #{tpu_custom_call.1} parent=0 // pred_fallthru
    _
  // Predicated region
  $region10: #{tpu_custom_call.1} parent=0 // pred_check
    _
  $region11: #{tpu_custom_call.1} parent=0 // pred_check_branch
    %13 = sbr.rel (0) target = $region13
  $region12: #{tpu_custom_call.1} parent=0 // pred_region
    _
  $region13: #{tpu_custom_call.1} parent=0 // pred_fallthru
    _
  %v14 = vld [vmem:[%s0] sm:$0xff]
  %v15 = vld [vmem:[%s0 + $0x8] sm:$0xff]
  %v16 = vld [vmem:[%s0 + $0x10] sm:$0xff]
  %v17 = vld [vmem:[%s0 + $0x18] sm:$0xff]
  %v18 = vld [vmem:[%s0 + $0x20] sm:$0xff]
  %v19 = vld [vmem:[%s0 + $0x28] sm:$0xff]
  %v20 = vld [vmem:[%s0 + $0x30] sm:$0xff]
  %v21 = vld [vmem:[%s0 + $0x38] sm:$0xff]
  %v22 = vld [vmem:[%s0 + $0x40] sm:$0xff]
  %v23 = vld [vmem:[%s0 + $0x48] sm:$0xff]
  %v24 = vld [vmem:[%s0 + $0x50] sm:$0xff]
  %v25 = vld [vmem:[%s0 + $0x58] sm:$0xff]
  %v26 = vld [vmem:[%s0 + $0x60] sm:$0xff]
  %v27 = vld [vmem:[%s0 + $0x68] sm:$0xff]
  %v28 = vld [vmem:[%s0 + $0x70] sm:$0xff]
  %v29 = vld [vmem:[%s0 + $0x78] sm:$0xff]
  %v30 = vld [vmem:[%s0 + $0x80] sm:$0xff]
  %v31 = vld [vmem:[%s0 + $0x88] sm:$0xff]
  %v32 = vld [vmem:[%s0 + $0x90] sm:$0xff]
  %v33 = vld [vmem:[%s0 + $0x98] sm:$0xff]
  %v34 = vld [vmem:[%s0 + $0xa0] sm:$0xff]
  %v35 = vld [vmem:[%s0 + $0xa8] sm:$0xff]
  %v36 = vld [vmem:[%s0 + $0xb0] sm:$0xff]
  %v37 = vld [vmem:[%s0 + $0xb8] sm:$0xff]
  %v38 = vld [vmem:[%s0 + $0xc0] sm:$0xff]
  %v39 = vld [vmem:[%s0 + $0xc8] sm:$0xff]
  %v40 = vld [vmem:[%s0 + $0xd0] sm:$0xff]
  %v41 = vld [vmem:[%s0 + $0xd8] sm:$0xff]
  %v42 = vld [vmem:[%s0 + $0xe0] sm:$0xff]
  %v43 = vld [vmem:[%s0 + $0xe8] sm:$0xff]
  %v44 = vld [vmem:[%s0 + $0xf0] sm:$0xff]
  %v45 = vld [vmem:[%s0 + $0xf8] sm:$0xff]
  %v46 = vld [vmem:[%s0 + $0x100] sm:$0xff]
  %v47 = vld [vmem:[%s0 + $0x108] sm:$0xff]
  %v48 = vld [vmem:[%s0 + $0x110] sm:$0xff]
  %v49 = vld [vmem:[%s0 + $0x118] sm:$0xff]
  %v50 = vld [vmem:[%s0 + $0x120] sm:$0xff]
  %v51 = vld [vmem:[%s0 + $0x128] sm:$0xff]
  %v52 = vld [vmem:[%s0 + $0x130] sm:$0xff]
  %v53 = vld [vmem:[%s0 + $0x138] sm:$0xff]
  %v54 = vld [vmem:[%s0 + $0x140] sm:$0xff]
  %v55 = vld [vmem:[%s0 + $0x148] sm:$0xff]
  %v56 = vld [vmem:[%s0 + $0x150] sm:$0xff]
  %v57 = vld [vmem:[%s0 + $0x158] sm:$0xff]
  %v58 = vld [vmem:[%s0 + $0x160] sm:$0xff]
  %v59 = vld [vmem:[%s0 + $0x168] sm:$0xff]
  %v60 = vld [vmem:[%s0 + $0x170] sm:$0xff]
  %v61 = vld [vmem:[%s0 + $0x178] sm:$0xff]
  %v62 = vld [vmem:[%s0 + $0x180] sm:$0xff]
  %v63 = vld [vmem:[%s0 + $0x188] sm:$0xff]
  %v64 = vld [vmem:[%s0 + $0x190] sm:$0xff]
  %v65 = vld [vmem:[%s0 + $0x198] sm:$0xff]
  %v66 = vld [vmem:[%s0 + $0x1a0] sm:$0xff]
  %v67 = vld [vmem:[%s0 + $0x1a8] sm:$0xff]
  %v68 = vld [vmem:[%s0 + $0x1b0] sm:$0xff]
  %v69 = vld [vmem:[%s0 + $0x1b8] sm:$0xff]
  %v70 = vld [vmem:[%s0 + $0x1c0] sm:$0xff]
  %v71 = vld [vmem:[%s0 + $0x1c8] sm:$0xff]
  %v72 = vld [vmem:[%s0 + $0x1d0] sm:$0xff]
  %v73 = vld [vmem:[%s0 + $0x1d8] sm:$0xff]
  %v74 = vld [vmem:[%s0 + $0x1e0] sm:$0xff]
  %v75 = vld [vmem:[%s0 + $0x1e8] sm:$0xff]
  %v76 = vld [vmem:[%s0 + $0x1f0] sm:$0xff]
  %v77 = vld [vmem:[%s0 + $0x1f8] sm:$0xff]
  %v78 = vld [vmem:[%s0 + $0x200] sm:$0xff]
  %v79 = vld [vmem:[%s0 + $0x208] sm:$0xff]
  %v80 = vld [vmem:[%s0 + $0x210] sm:$0xff]
  %v81 = vld [vmem:[%s0 + $0x218] sm:$0xff]
  %v82 = vld [vmem:[%s0 + $0x220] sm:$0xff]
  %v83 = vld [vmem:[%s0 + $0x228] sm:$0xff]
  %v84 = vld [vmem:[%s0 + $0x230] sm:$0xff]
  %v85 = vld [vmem:[%s0 + $0x238] sm:$0xff]
  %v86 = vld [vmem:[%s0 + $0x240] sm:$0xff]
  %v87 = vld [vmem:[%s0 + $0x248] sm:$0xff]
  %v88 = vld [vmem:[%s0 + $0x250] sm:$0xff]
  %v89 = vld [vmem:[%s0 + $0x258] sm:$0xff]
  %v90 = vld [vmem:[%s0 + $0x260] sm:$0xff]
  %v91 = vld [vmem:[%s0 + $0x268] sm:$0xff]
  %v92 = vld [vmem:[%s0 + $0x270] sm:$0xff]
  %v93 = vld [vmem:[%s0 + $0x278] sm:$0xff]
  %v94 = vld [vmem:[%s0 + $0x280] sm:$0xff]
  %v95 = vld [vmem:[%s0 + $0x288] sm:$0xff]
  %v96 = vld [vmem:[%s0 + $0x290] sm:$0xff]
  %v97 = vld [vmem:[%s0 + $0x298] sm:$0xff]
  %v98 = vld [vmem:[%s0 + $0x2a0] sm:$0xff]
  %v99 = vld [vmem:[%s0 + $0x2a8] sm:$0xff]
  %v100 = vld [vmem:[%s0 + $0x2b0] sm:$0xff]
  %v101 = vld [vmem:[%s0 + $0x2b8] sm:$0xff]
  %v102 = vld [vmem:[%s0 + $0x2c0] sm:$0xff]
  %v103 = vld [vmem:[%s0 + $0x2c8] sm:$0xff]
  %v104 = vld [vmem:[%s0 + $0x2d0] sm:$0xff]
  %v105 = vld [vmem:[%s0 + $0x2d8] sm:$0xff]
  %v106 = vld [vmem:[%s0 + $0x2e0] sm:$0xff]
  %v107 = vld [vmem:[%s0 + $0x2e8] sm:$0xff]
  %v108 = vld [vmem:[%s0 + $0x2f0] sm:$0xff]
  %v109 = vld [vmem:[%s0 + $0x2f8] sm:$0xff]
  %v110 = vld [vmem:[%s0 + $0x300] sm:$0xff]
  %v111 = vld [vmem:[%s0 + $0x308] sm:$0xff]
  %v112 = vld [vmem:[%s0 + $0x310] sm:$0xff]
  %v113 = vld [vmem:[%s0 + $0x318] sm:$0xff]
  %v114 = vld [vmem:[%s0 + $0x320] sm:$0xff]
  %v115 = vld [vmem:[%s0 + $0x328] sm:$0xff]
  %v116 = vld [vmem:[%s0 + $0x330] sm:$0xff]
  %v117 = vld [vmem:[%s0 + $0x338] sm:$0xff]
  %v118 = vld [vmem:[%s0 + $0x340] sm:$0xff]
  %v119 = vld [vmem:[%s0 + $0x348] sm:$0x3]
  %v120 = vld [vmem:[%s0 + $0x350] sm:$0x3]
  %v121 = vld [vmem:[%s0 + $0x358] sm:$0x3]
  %v122 = vld [vmem:[%s0 + $0x360] sm:$0x3]
  %v123 = vld [vmem:[%s0 + $0x368] sm:$0x3]
  %v124 = vld [vmem:[%s0 + $0x370] sm:$0x3]
  %v125 = vld [vmem:[%s0 + $0x378] sm:$0x3]
  %v126 = vadd.f32 %v14, %v15
  %v127 = vadd.f32 %v126, %v16
  %v128 = vadd.f32 %v127, %v17
  %v129 = vadd.f32 %v128, %v18
  %v130 = vadd.f32 %v129, %v19
  %vm131 = vcmask 130048
  %v132 = vsel %vm131, %v20, 0.0
  %v133 = vadd.f32 %v130, %v132
  %134 = vadd.xlane.f32.xlu0 %v133
  %v135 = vpop.xlane.xlu0 %134
  %v136 = vadd.f32 %v21, %v22
  %v137 = vadd.f32 %v136, %v23
  %v138 = vadd.f32 %v137, %v24
  %v139 = vadd.f32 %v138, %v25
  %v140 = vadd.f32 %v139, %v26
  %v141 = vsel %vm131, %v27, 0.0
  %v142 = vadd.f32 %v140, %v141
  %143 = vadd.xlane.f32.xlu0 %v142
  %v144 = vpop.xlane.xlu0 %143
  %v145 = vadd.f32 %v28, %v29
  %v146 = vadd.f32 %v145, %v30
  %v147 = vadd.f32 %v146, %v31
  %v148 = vadd.f32 %v147, %v32
  %v149 = vadd.f32 %v148, %v33
  %v150 = vsel %vm131, %v34, 0.0
  %v151 = vadd.f32 %v149, %v150
  %152 = vadd.xlane.f32.xlu0 %v151
  %v153 = vpop.xlane.xlu0 %152
  %v154 = vadd.f32 %v35, %v36
  %v155 = vadd.f32 %v154, %v37
  %v156 = vadd.f32 %v155, %v38
  %v157 = vadd.f32 %v156, %v39
  %v158 = vadd.f32 %v157, %v40
  %v159 = vsel %vm131, %v41, 0.0
  %v160 = vadd.f32 %v158, %v159
  %161 = vadd.xlane.f32.xlu0 %v160
  %v162 = vpop.xlane.xlu0 %161
  %v163 = vadd.f32 %v42, %v43
  %v164 = vadd.f32 %v163, %v44
  %v165 = vadd.f32 %v164, %v45
  %v166 = vadd.f32 %v165, %v46
  %v167 = vadd.f32 %v166, %v47
  %v168 = vsel %vm131, %v48, 0.0
  %v169 = vadd.f32 %v167, %v168
  %170 = vadd.xlane.f32.xlu0 %v169
  %v171 = vpop.xlane.xlu0 %170
  %v172 = vadd.f32 %v49, %v50
  %v173 = vadd.f32 %v172, %v51
  %v174 = vadd.f32 %v173, %v52
  %v175 = vadd.f32 %v174, %v53
  %v176 = vadd.f32 %v175, %v54
  %v177 = vsel %vm131, %v55, 0.0
  %v178 = vadd.f32 %v176, %v177
  %179 = vadd.xlane.f32.xlu0 %v178
  %v180 = vpop.xlane.xlu0 %179
  %v181 = vadd.f32 %v56, %v57
  %v182 = vadd.f32 %v181, %v58
  %v183 = vadd.f32 %v182, %v59
  %v184 = vadd.f32 %v183, %v60
  %v185 = vadd.f32 %v184, %v61
  %v186 = vsel %vm131, %v62, 0.0
  %v187 = vadd.f32 %v185, %v186
  %188 = vadd.xlane.f32.xlu0 %v187
  %v189 = vpop.xlane.xlu0 %188
  %v190 = vadd.f32 %v63, %v64
  %v191 = vadd.f32 %v190, %v65
  %v192 = vadd.f32 %v191, %v66
  %v193 = vadd.f32 %v192, %v67
  %v194 = vadd.f32 %v193, %v68
  %v195 = vsel %vm131, %v69, 0.0
  %v196 = vadd.f32 %v194, %v195
  %197 = vadd.xlane.f32.xlu0 %v196
  %v198 = vpop.xlane.xlu0 %197
  %v199 = vadd.f32 %v70, %v71
  %v200 = vadd.f32 %v199, %v72
  %v201 = vadd.f32 %v200, %v73
  %v202 = vadd.f32 %v201, %v74
  %v203 = vadd.f32 %v202, %v75
  %v204 = vsel %vm131, %v76, 0.0
  %v205 = vadd.f32 %v203, %v204
  %206 = vadd.xlane.f32.xlu0 %v205
  %v207 = vpop.xlane.xlu0 %206
  %v208 = vadd.f32 %v77, %v78
  %v209 = vadd.f32 %v208, %v79
  %v210 = vadd.f32 %v209, %v80
  %v211 = vadd.f32 %v210, %v81
  %v212 = vadd.f32 %v211, %v82
  %v213 = vsel %vm131, %v83, 0.0
  %v214 = vadd.f32 %v212, %v213
  %215 = vadd.xlane.f32.xlu0 %v214
  %v216 = vpop.xlane.xlu0 %215
  %v217 = vadd.f32 %v84, %v85
  %v218 = vadd.f32 %v217, %v86
  %v219 = vadd.f32 %v218, %v87
  %v220 = vadd.f32 %v219, %v88
  %v221 = vadd.f32 %v220, %v89
  %v222 = vsel %vm131, %v90, 0.0
  %v223 = vadd.f32 %v221, %v222
  %224 = vadd.xlane.f32.xlu0 %v223
  %v225 = vpop.xlane.xlu0 %224
  %v226 = vadd.f32 %v91, %v92
  %v227 = vadd.f32 %v226, %v93
  %v228 = vadd.f32 %v227, %v94
  %v229 = vadd.f32 %v228, %v95
  %v230 = vadd.f32 %v229, %v96
  %v231 = vsel %vm131, %v97, 0.0
  %v232 = vadd.f32 %v230, %v231
  %233 = vadd.xlane.f32.xlu0 %v232
  %v234 = vpop.xlane.xlu0 %233
  %v235 = vadd.f32 %v98, %v99
  %v236 = vadd.f32 %v235, %v100
  %v237 = vadd.f32 %v236, %v101
  %v238 = vadd.f32 %v237, %v102
  %v239 = vadd.f32 %v238, %v103
  %v240 = vsel %vm131, %v104, 0.0
  %v241 = vadd.f32 %v239, %v240
  %242 = vadd.xlane.f32.xlu0 %v241
  %v243 = vpop.xlane.xlu0 %242
  %v244 = vadd.f32 %v105, %v106
  %v245 = vadd.f32 %v244, %v107
  %v246 = vadd.f32 %v245, %v108
  %v247 = vadd.f32 %v246, %v109
  %v248 = vadd.f32 %v247, %v110
  %v249 = vsel %vm131, %v111, 0.0
  %v250 = vadd.f32 %v248, %v249
  %251 = vadd.xlane.f32.xlu0 %v250
  %v252 = vpop.xlane.xlu0 %251
  %v253 = vadd.f32 %v112, %v113
  %v254 = vadd.f32 %v253, %v114
  %v255 = vadd.f32 %v254, %v115
  %v256 = vadd.f32 %v255, %v116
  %v257 = vadd.f32 %v256, %v117
  %v258 = vsel %vm131, %v118, 0.0
  %v259 = vadd.f32 %v257, %v258
  %260 = vadd.xlane.f32.xlu0 %v259
  %v261 = vpop.xlane.xlu0 %260
  %vm262 = vcmask 1041408
  %v263 = vsel %vm262, %v119, 0.0
  %v264 = vsel %vm262, %v120, 0.0
  %v265 = vadd.f32 %v263, %v264
  %v266 = vsel %vm262, %v121, 0.0
  %v267 = vadd.f32 %v265, %v266
  %v268 = vsel %vm262, %v122, 0.0
  %v269 = vadd.f32 %v267, %v268
  %v270 = vsel %vm262, %v123, 0.0
  %v271 = vadd.f32 %v269, %v270
  %v272 = vsel %vm262, %v124, 0.0
  %v273 = vadd.f32 %v271, %v272
  %vm274 = vcmask 123904
  %v275 = vsel %vm274, %v125, 0.0
  %v276 = vadd.f32 %v273, %v275
  %277 = vadd.xlane.f32.xlu0 %v276
  %v278 = vpop.xlane.xlu0 %277
  %v279 = vadd.f32 %v135, 0.0
  %v280 = vadd.f32 %v144, 0.0
  %v281 = vadd.f32 %v153, 0.0
  %v282 = vadd.f32 %v162, 0.0
  %v283 = vadd.f32 %v171, 0.0
  %v284 = vadd.f32 %v180, 0.0
  %v285 = vadd.f32 %v189, 0.0
  %v286 = vadd.f32 %v198, 0.0
  %v287 = vadd.f32 %v207, 0.0
  %v288 = vadd.f32 %v216, 0.0
  %v289 = vadd.f32 %v225, 0.0
  %v290 = vadd.f32 %v234, 0.0
  %v291 = vadd.f32 %v243, 0.0
  %v292 = vadd.f32 %v252, 0.0
  %v293 = vadd.f32 %v261, 0.0
  %v294 = vadd.f32 %v278, 0.0
  %v295 = vmul.f32 %v279, 0.0012755102
  %v296 = vmul.f32 %v280, 0.0012755102
  %v297 = vmul.f32 %v281, 0.0012755102
  %v298 = vmul.f32 %v282, 0.0012755102
  %v299 = vmul.f32 %v283, 0.0012755102
  %v300 = vmul.f32 %v284, 0.0012755102
  %v301 = vmul.f32 %v285, 0.0012755102
  %v302 = vmul.f32 %v286, 0.0012755102
  %v303 = vmul.f32 %v287, 0.0012755102
  %v304 = vmul.f32 %v288, 0.0012755102
  %v305 = vmul.f32 %v289, 0.0012755102
  %v306 = vmul.f32 %v290, 0.0012755102
  %v307 = vmul.f32 %v291, 0.0012755102
  %v308 = vmul.f32 %v292, 0.0012755102
  %v309 = vmul.f32 %v293, 0.0012755102
  %v310 = vmul.f32 %v294, 0.0012755102
  %v311 = vsub.f32 %v14, %v295
  %v312 = vsub.f32 %v15, %v295
  %v313 = vsub.f32 %v16, %v295
  %v314 = vsub.f32 %v17, %v295
  %v315 = vsub.f32 %v18, %v295
  %v316 = vsub.f32 %v19, %v295
  %v317 = vsub.f32 %v20, %v295
  %v318 = vsub.f32 %v21, %v296
  %v319 = vsub.f32 %v22, %v296
  %v320 = vsub.f32 %v23, %v296
  %v321 = vsub.f32 %v24, %v296
  %v322 = vsub.f32 %v25, %v296
  %v323 = vsub.f32 %v26, %v296
  %v324 = vsub.f32 %v27, %v296
  %v325 = vsub.f32 %v28, %v297
  %v326 = vsub.f32 %v29, %v297
  %v327 = vsub.f32 %v30, %v297
  %v328 = vsub.f32 %v31, %v297
  %v329 = vsub.f32 %v32, %v297
  %v330 = vsub.f32 %v33, %v297
  %v331 = vsub.f32 %v34, %v297
  %v332 = vsub.f32 %v35, %v298
  %v333 = vsub.f32 %v36, %v298
  %v334 = vsub.f32 %v37, %v298
  %v335 = vsub.f32 %v38, %v298
  %v336 = vsub.f32 %v39, %v298
  %v337 = vsub.f32 %v40, %v298
  %v338 = vsub.f32 %v41, %v298
  %v339 = vsub.f32 %v42, %v299
  %v340 = vsub.f32 %v43, %v299
  %v341 = vsub.f32 %v44, %v299
  %v342 = vsub.f32 %v45, %v299
  %v343 = vsub.f32 %v46, %v299
  %v344 = vsub.f32 %v47, %v299
  %v345 = vsub.f32 %v48, %v299
  %v346 = vsub.f32 %v49, %v300
  %v347 = vsub.f32 %v50, %v300
  %v348 = vsub.f32 %v51, %v300
  %v349 = vsub.f32 %v52, %v300
  %v350 = vsub.f32 %v53, %v300
  %v351 = vsub.f32 %v54, %v300
  %v352 = vsub.f32 %v55, %v300
  %v353 = vsub.f32 %v56, %v301
  %v354 = vsub.f32 %v57, %v301
  %v355 = vsub.f32 %v58, %v301
  %v356 = vsub.f32 %v59, %v301
  %v357 = vsub.f32 %v60, %v301
  %v358 = vsub.f32 %v61, %v301
  %v359 = vsub.f32 %v62, %v301
  %v360 = vsub.f32 %v63, %v302
  %v361 = vsub.f32 %v64, %v302
  %v362 = vsub.f32 %v65, %v302
  %v363 = vsub.f32 %v66, %v302
  %v364 = vsub.f32 %v67, %v302
  %v365 = vsub.f32 %v68, %v302
  %v366 = vsub.f32 %v69, %v302
  %v367 = vsub.f32 %v70, %v303
  %v368 = vsub.f32 %v71, %v303
  %v369 = vsub.f32 %v72, %v303
  %v370 = vsub.f32 %v73, %v303
  %v371 = vsub.f32 %v74, %v303
  %v372 = vsub.f32 %v75, %v303
  %v373 = vsub.f32 %v76, %v303
  %v374 = vsub.f32 %v77, %v304
  %v375 = vsub.f32 %v78, %v304
  %v376 = vsub.f32 %v79, %v304
  %v377 = vsub.f32 %v80, %v304
  %v378 = vsub.f32 %v81, %v304
  %v379 = vsub.f32 %v82, %v304
  %v380 = vsub.f32 %v83, %v304
  %v381 = vsub.f32 %v84, %v305
  %v382 = vsub.f32 %v85, %v305
  %v383 = vsub.f32 %v86, %v305
  %v384 = vsub.f32 %v87, %v305
  %v385 = vsub.f32 %v88, %v305
  %v386 = vsub.f32 %v89, %v305
  %v387 = vsub.f32 %v90, %v305
  %v388 = vsub.f32 %v91, %v306
  %v389 = vsub.f32 %v92, %v306
  %v390 = vsub.f32 %v93, %v306
  %v391 = vsub.f32 %v94, %v306
  %v392 = vsub.f32 %v95, %v306
  %v393 = vsub.f32 %v96, %v306
  %v394 = vsub.f32 %v97, %v306
  %v395 = vsub.f32 %v98, %v307
  %v396 = vsub.f32 %v99, %v307
  %v397 = vsub.f32 %v100, %v307
  %v398 = vsub.f32 %v101, %v307
  %v399 = vsub.f32 %v102, %v307
  %v400 = vsub.f32 %v103, %v307
  %v401 = vsub.f32 %v104, %v307
  %v402 = vsub.f32 %v105, %v308
  %v403 = vsub.f32 %v106, %v308
  %v404 = vsub.f32 %v107, %v308
  %v405 = vsub.f32 %v108, %v308
  %v406 = vsub.f32 %v109, %v308
  %v407 = vsub.f32 %v110, %v308
  %v408 = vsub.f32 %v111, %v308
  %v409 = vsub.f32 %v112, %v309
  %v410 = vsub.f32 %v113, %v309
  %v411 = vsub.f32 %v114, %v309
  %v412 = vsub.f32 %v115, %v309
  %v413 = vsub.f32 %v116, %v309
  %v414 = vsub.f32 %v117, %v309
  %v415 = vsub.f32 %v118, %v309
  %v416 = vsub.f32 %v119, %v310
  %v417 = vsub.f32 %v120, %v310
  %v418 = vsub.f32 %v121, %v310
  %v419 = vsub.f32 %v122, %v310
  %v420 = vsub.f32 %v123, %v310
  %v421 = vsub.f32 %v124, %v310
  %v422 = vsub.f32 %v125, %v310
  %v423 = vmul.f32 %v311, %v311
  %v424 = vmul.f32 %v312, %v312
  %v425 = vmul.f32 %v313, %v313
  %v426 = vmul.f32 %v314, %v314
  %v427 = vmul.f32 %v315, %v315
  %v428 = vmul.f32 %v316, %v316
  %v429 = vmul.f32 %v317, %v317
  %v430 = vmul.f32 %v318, %v318
  %v431 = vmul.f32 %v319, %v319
  %v432 = vmul.f32 %v320, %v320
  %v433 = vmul.f32 %v321, %v321
  %v434 = vmul.f32 %v322, %v322
  %v435 = vmul.f32 %v323, %v323
  %v436 = vmul.f32 %v324, %v324
  %v437 = vmul.f32 %v325, %v325
  %v438 = vmul.f32 %v326, %v326
  %v439 = vmul.f32 %v327, %v327
  %v440 = vmul.f32 %v328, %v328
  %v441 = vmul.f32 %v329, %v329
  %v442 = vmul.f32 %v330, %v330
  %v443 = vmul.f32 %v331, %v331
  %v444 = vmul.f32 %v332, %v332
  %v445 = vmul.f32 %v333, %v333
  %v446 = vmul.f32 %v334, %v334
  %v447 = vmul.f32 %v335, %v335
  %v448 = vmul.f32 %v336, %v336
  %v449 = vmul.f32 %v337, %v337
  %v450 = vmul.f32 %v338, %v338
  %v451 = vmul.f32 %v339, %v339
  %v452 = vmul.f32 %v340, %v340
  %v453 = vmul.f32 %v341, %v341
  %v454 = vmul.f32 %v342, %v342
  %v455 = vmul.f32 %v343, %v343
  %v456 = vmul.f32 %v344, %v344
  %v457 = vmul.f32 %v345, %v345
  %v458 = vmul.f32 %v346, %v346
  %v459 = vmul.f32 %v347, %v347
  %v460 = vmul.f32 %v348, %v348
  %v461 = vmul.f32 %v349, %v349
  %v462 = vmul.f32 %v350, %v350
  %v463 = vmul.f32 %v351, %v351
  %v464 = vmul.f32 %v352, %v352
  %v465 = vmul.f32 %v353, %v353
  %v466 = vmul.f32 %v354, %v354
  %v467 = vmul.f32 %v355, %v355
  %v468 = vmul.f32 %v356, %v356
  %v469 = vmul.f32 %v357, %v357
  %v470 = vmul.f32 %v358, %v358
  %v471 = vmul.f32 %v359, %v359
  %v472 = vmul.f32 %v360, %v360
  %v473 = vmul.f32 %v361, %v361
  %v474 = vmul.f32 %v362, %v362
  %v475 = vmul.f32 %v363, %v363
  %v476 = vmul.f32 %v364, %v364
  %v477 = vmul.f32 %v365, %v365
  %v478 = vmul.f32 %v366, %v366
  %v479 = vmul.f32 %v367, %v367
  %v480 = vmul.f32 %v368, %v368
  %v481 = vmul.f32 %v369, %v369
  %v482 = vmul.f32 %v370, %v370
  %v483 = vmul.f32 %v371, %v371
  %v484 = vmul.f32 %v372, %v372
  %v485 = vmul.f32 %v373, %v373
  %v486 = vmul.f32 %v374, %v374
  %v487 = vmul.f32 %v375, %v375
  %v488 = vmul.f32 %v376, %v376
  %v489 = vmul.f32 %v377, %v377
  %v490 = vmul.f32 %v378, %v378
  %v491 = vmul.f32 %v379, %v379
  %v492 = vmul.f32 %v380, %v380
  %v493 = vmul.f32 %v381, %v381
  %v494 = vmul.f32 %v382, %v382
  %v495 = vmul.f32 %v383, %v383
  %v496 = vmul.f32 %v384, %v384
  %v497 = vmul.f32 %v385, %v385
  %v498 = vmul.f32 %v386, %v386
  %v499 = vmul.f32 %v387, %v387
  %v500 = vmul.f32 %v388, %v388
  %v501 = vmul.f32 %v389, %v389
  %v502 = vmul.f32 %v390, %v390
  %v503 = vmul.f32 %v391, %v391
  %v504 = vmul.f32 %v392, %v392
  %v505 = vmul.f32 %v393, %v393
  %v506 = vmul.f32 %v394, %v394
  %v507 = vmul.f32 %v395, %v395
  %v508 = vmul.f32 %v396, %v396
  %v509 = vmul.f32 %v397, %v397
  %v510 = vmul.f32 %v398, %v398
  %v511 = vmul.f32 %v399, %v399
  %v512 = vmul.f32 %v400, %v400
  %v513 = vmul.f32 %v401, %v401
  %v514 = vmul.f32 %v402, %v402
  %v515 = vmul.f32 %v403, %v403
  %v516 = vmul.f32 %v404, %v404
  %v517 = vmul.f32 %v405, %v405
  %v518 = vmul.f32 %v406, %v406
  %v519 = vmul.f32 %v407, %v407
  %v520 = vmul.f32 %v408, %v408
  %v521 = vmul.f32 %v409, %v409
  %v522 = vmul.f32 %v410, %v410
  %v523 = vmul.f32 %v411, %v411
  %v524 = vmul.f32 %v412, %v412
  %v525 = vmul.f32 %v413, %v413
  %v526 = vmul.f32 %v414, %v414
  %v527 = vmul.f32 %v415, %v415
  %v528 = vmul.f32 %v416, %v416
  %v529 = vmul.f32 %v417, %v417
  %v530 = vmul.f32 %v418, %v418
  %v531 = vmul.f32 %v419, %v419
  %v532 = vmul.f32 %v420, %v420
  %v533 = vmul.f32 %v421, %v421
  %v534 = vmul.f32 %v422, %v422
  %v535 = vadd.f32 %v423, %v424
  %v536 = vadd.f32 %v535, %v425
  %v537 = vadd.f32 %v536, %v426
  %v538 = vadd.f32 %v537, %v427
  %v539 = vadd.f32 %v538, %v428
  %v540 = vsel %vm131, %v429, 0.0
  %v541 = vadd.f32 %v539, %v540
  %542 = vadd.xlane.f32.xlu0 %v541
  %v543 = vpop.xlane.xlu0 %542
  %v544 = vadd.f32 %v430, %v431
  %v545 = vadd.f32 %v544, %v432
  %v546 = vadd.f32 %v545, %v433
  %v547 = vadd.f32 %v546, %v434
  %v548 = vadd.f32 %v547, %v435
  %v549 = vsel %vm131, %v436, 0.0
  %v550 = vadd.f32 %v548, %v549
  %551 = vadd.xlane.f32.xlu0 %v550
  %v552 = vpop.xlane.xlu0 %551
  %v553 = vadd.f32 %v437, %v438
  %v554 = vadd.f32 %v553, %v439
  %v555 = vadd.f32 %v554, %v440
  %v556 = vadd.f32 %v555, %v441
  %v557 = vadd.f32 %v556, %v442
  %v558 = vsel %vm131, %v443, 0.0
  %v559 = vadd.f32 %v557, %v558
  %560 = vadd.xlane.f32.xlu0 %v559
  %v561 = vpop.xlane.xlu0 %560
  %v562 = vadd.f32 %v444, %v445
  %v563 = vadd.f32 %v562, %v446
  %v564 = vadd.f32 %v563, %v447
  %v565 = vadd.f32 %v564, %v448
  %v566 = vadd.f32 %v565, %v449
  %v567 = vsel %vm131, %v450, 0.0
  %v568 = vadd.f32 %v566, %v567
  %569 = vadd.xlane.f32.xlu0 %v568
  %v570 = vpop.xlane.xlu0 %569
  %v571 = vadd.f32 %v451, %v452
  %v572 = vadd.f32 %v571, %v453
  %v573 = vadd.f32 %v572, %v454
  %v574 = vadd.f32 %v573, %v455
  %v575 = vadd.f32 %v574, %v456
  %v576 = vsel %vm131, %v457, 0.0
  %v577 = vadd.f32 %v575, %v576
  %578 = vadd.xlane.f32.xlu0 %v577
  %v579 = vpop.xlane.xlu0 %578
  %v580 = vadd.f32 %v458, %v459
  %v581 = vadd.f32 %v580, %v460
  %v582 = vadd.f32 %v581, %v461
  %v583 = vadd.f32 %v582, %v462
  %v584 = vadd.f32 %v583, %v463
  %v585 = vsel %vm131, %v464, 0.0
  %v586 = vadd.f32 %v584, %v585
  %587 = vadd.xlane.f32.xlu0 %v586
  %v588 = vpop.xlane.xlu0 %587
  %v589 = vadd.f32 %v465, %v466
  %v590 = vadd.f32 %v589, %v467
  %v591 = vadd.f32 %v590, %v468
  %v592 = vadd.f32 %v591, %v469
  %v593 = vadd.f32 %v592, %v470
  %v594 = vsel %vm131, %v471, 0.0
  %v595 = vadd.f32 %v593, %v594
  %596 = vadd.xlane.f32.xlu0 %v595
  %v597 = vpop.xlane.xlu0 %596
  %v598 = vadd.f32 %v472, %v473
  %v599 = vadd.f32 %v598, %v474
  %v600 = vadd.f32 %v599, %v475
  %v601 = vadd.f32 %v600, %v476
  %v602 = vadd.f32 %v601, %v477
  %v603 = vsel %vm131, %v478, 0.0
  %v604 = vadd.f32 %v602, %v603
  %605 = vadd.xlane.f32.xlu0 %v604
  %v606 = vpop.xlane.xlu0 %605
  %v607 = vadd.f32 %v479, %v480
  %v608 = vadd.f32 %v607, %v481
  %v609 = vadd.f32 %v608, %v482
  %v610 = vadd.f32 %v609, %v483
  %v611 = vadd.f32 %v610, %v484
  %v612 = vsel %vm131, %v485, 0.0
  %v613 = vadd.f32 %v611, %v612
  %614 = vadd.xlane.f32.xlu0 %v613
  %v615 = vpop.xlane.xlu0 %614
  %v616 = vadd.f32 %v486, %v487
  %v617 = vadd.f32 %v616, %v488
  %v618 = vadd.f32 %v617, %v489
  %v619 = vadd.f32 %v618, %v490
  %v620 = vadd.f32 %v619, %v491
  %v621 = vsel %vm131, %v492, 0.0
  %v622 = vadd.f32 %v620, %v621
  %623 = vadd.xlane.f32.xlu0 %v622
  %v624 = vpop.xlane.xlu0 %623
  %v625 = vadd.f32 %v493, %v494
  %v626 = vadd.f32 %v625, %v495
  %v627 = vadd.f32 %v626, %v496
  %v628 = vadd.f32 %v627, %v497
  %v629 = vadd.f32 %v628, %v498
  %v630 = vsel %vm131, %v499, 0.0
  %v631 = vadd.f32 %v629, %v630
  %632 = vadd.xlane.f32.xlu0 %v631
  %v633 = vpop.xlane.xlu0 %632
  %v634 = vadd.f32 %v500, %v501
  %v635 = vadd.f32 %v634, %v502
  %v636 = vadd.f32 %v635, %v503
  %v637 = vadd.f32 %v636, %v504
  %v638 = vadd.f32 %v637, %v505
  %v639 = vsel %vm131, %v506, 0.0
  %v640 = vadd.f32 %v638, %v639
  %641 = vadd.xlane.f32.xlu0 %v640
  %v642 = vpop.xlane.xlu0 %641
  %v643 = vadd.f32 %v507, %v508
  %v644 = vadd.f32 %v643, %v509
  %v645 = vadd.f32 %v644, %v510
  %v646 = vadd.f32 %v645, %v511
  %v647 = vadd.f32 %v646, %v512
  %v648 = vsel %vm131, %v513, 0.0
  %v649 = vadd.f32 %v647, %v648
  %650 = vadd.xlane.f32.xlu0 %v649
  %v651 = vpop.xlane.xlu0 %650
  %v652 = vadd.f32 %v514, %v515
  %v653 = vadd.f32 %v652, %v516
  %v654 = vadd.f32 %v653, %v517
  %v655 = vadd.f32 %v654, %v518
  %v656 = vadd.f32 %v655, %v519
  %v657 = vsel %vm131, %v520, 0.0
  %v658 = vadd.f32 %v656, %v657
  %659 = vadd.xlane.f32.xlu0 %v658
  %v660 = vpop.xlane.xlu0 %659
  %v661 = vadd.f32 %v521, %v522
  %v662 = vadd.f32 %v661, %v523
  %v663 = vadd.f32 %v662, %v524
  %v664 = vadd.f32 %v663, %v525
  %v665 = vadd.f32 %v664, %v526
  %v666 = vsel %vm131, %v527, 0.0
  %v667 = vadd.f32 %v665, %v666
  %668 = vadd.xlane.f32.xlu0 %v667
  %v669 = vpop.xlane.xlu0 %668
  %v670 = vsel %vm262, %v528, 0.0
  %v671 = vsel %vm262, %v529, 0.0
  %v672 = vadd.f32 %v670, %v671
  %v673 = vsel %vm262, %v530, 0.0
  %v674 = vadd.f32 %v672, %v673
  %v675 = vsel %vm262, %v531, 0.0
  %v676 = vadd.f32 %v674, %v675
  %v677 = vsel %vm262, %v532, 0.0
  %v678 = vadd.f32 %v676, %v677
  %v679 = vsel %vm262, %v533, 0.0
  %v680 = vadd.f32 %v678, %v679
  %v681 = vsel %vm274, %v534, 0.0
  %v682 = vadd.f32 %v680, %v681
  %683 = vadd.xlane.f32.xlu0 %v682
  %v684 = vpop.xlane.xlu0 %683
  %v685 = vadd.f32 %v543, 0.0
  %v686 = vadd.f32 %v552, 0.0
  %v687 = vadd.f32 %v561, 0.0
  %v688 = vadd.f32 %v570, 0.0
  %v689 = vadd.f32 %v579, 0.0
  %v690 = vadd.f32 %v588, 0.0
  %v691 = vadd.f32 %v597, 0.0
  %v692 = vadd.f32 %v606, 0.0
  %v693 = vadd.f32 %v615, 0.0
  %v694 = vadd.f32 %v624, 0.0
  %v695 = vadd.f32 %v633, 0.0
  %v696 = vadd.f32 %v642, 0.0
  %v697 = vadd.f32 %v651, 0.0
  %v698 = vadd.f32 %v660, 0.0
  %v699 = vadd.f32 %v669, 0.0
  %v700 = vadd.f32 %v684, 0.0
  %v701 = vmul.f32 %v685, 0.0012755102
  %v702 = vmul.f32 %v686, 0.0012755102
  %v703 = vmul.f32 %v687, 0.0012755102
  %v704 = vmul.f32 %v688, 0.0012755102
  %v705 = vmul.f32 %v689, 0.0012755102
  %v706 = vmul.f32 %v690, 0.0012755102
  %v707 = vmul.f32 %v691, 0.0012755102
  %v708 = vmul.f32 %v692, 0.0012755102
  %v709 = vmul.f32 %v693, 0.0012755102
  %v710 = vmul.f32 %v694, 0.0012755102
  %v711 = vmul.f32 %v695, 0.0012755102
  %v712 = vmul.f32 %v696, 0.0012755102
  %v713 = vmul.f32 %v697, 0.0012755102
  %v714 = vmul.f32 %v698, 0.0012755102
  %v715 = vmul.f32 %v699, 0.0012755102
  %v716 = vmul.f32 %v700, 0.0012755102
  %v717 = vadd.f32 %v701, 1e-05
  %v718 = vadd.f32 %v702, 1e-05
  %v719 = vadd.f32 %v703, 1e-05
  %v720 = vadd.f32 %v704, 1e-05
  %v721 = vadd.f32 %v705, 1e-05
  %v722 = vadd.f32 %v706, 1e-05
  %v723 = vadd.f32 %v707, 1e-05
  %v724 = vadd.f32 %v708, 1e-05
  %v725 = vadd.f32 %v709, 1e-05
  %v726 = vadd.f32 %v710, 1e-05
  %v727 = vadd.f32 %v711, 1e-05
  %v728 = vadd.f32 %v712, 1e-05
  %v729 = vadd.f32 %v713, 1e-05
  %v730 = vadd.f32 %v714, 1e-05
  %v731 = vadd.f32 %v715, 1e-05
  %v732 = vadd.f32 %v716, 1e-05
  %v733 = vrsqrt.pop %v717
  %v734 = vmul.f32 %v733, %v717
  %v735 = vmul.f32 %v734, %v733
  %v736 = vmul.f32 0.5, %v735
  %v737 = vsub.f32 1.5, %v736
  %v738 = vmul.f32 %v733, %v737
  %vm739 = vweird.f32 %v717
  %vm740 = vweird.f32 %v733
  %vm741 = vmor %vm739, %vm740
  %v742 = vsel %vm741, %v733, %v738
  %v743 = vrsqrt.pop %v718
  %v744 = vmul.f32 %v743, %v718
  %v745 = vmul.f32 %v744, %v743
  %v746 = vmul.f32 0.5, %v745
  %v747 = vsub.f32 1.5, %v746
  %v748 = vmul.f32 %v743, %v747
  %vm749 = vweird.f32 %v718
  %vm750 = vweird.f32 %v743
  %vm751 = vmor %vm749, %vm750
  %v752 = vsel %vm751, %v743, %v748
  %v753 = vrsqrt.pop %v719
  %v754 = vmul.f32 %v753, %v719
  %v755 = vmul.f32 %v754, %v753
  %v756 = vmul.f32 0.5, %v755
  %v757 = vsub.f32 1.5, %v756
  %v758 = vmul.f32 %v753, %v757
  %vm759 = vweird.f32 %v719
  %vm760 = vweird.f32 %v753
  %vm761 = vmor %vm759, %vm760
  %v762 = vsel %vm761, %v753, %v758
  %v763 = vrsqrt.pop %v720
  %v764 = vmul.f32 %v763, %v720
  %v765 = vmul.f32 %v764, %v763
  %v766 = vmul.f32 0.5, %v765
  %v767 = vsub.f32 1.5, %v766
  %v768 = vmul.f32 %v763, %v767
  %vm769 = vweird.f32 %v720
  %vm770 = vweird.f32 %v763
  %vm771 = vmor %vm769, %vm770
  %v772 = vsel %vm771, %v763, %v768
  %v773 = vrsqrt.pop %v721
  %v774 = vmul.f32 %v773, %v721
  %v775 = vmul.f32 %v774, %v773
  %v776 = vmul.f32 0.5, %v775
  %v777 = vsub.f32 1.5, %v776
  %v778 = vmul.f32 %v773, %v777
  %vm779 = vweird.f32 %v721
  %vm780 = vweird.f32 %v773
  %vm781 = vmor %vm779, %vm780
  %v782 = vsel %vm781, %v773, %v778
  %v783 = vrsqrt.pop %v722
  %v784 = vmul.f32 %v783, %v722
  %v785 = vmul.f32 %v784, %v783
  %v786 = vmul.f32 0.5, %v785
  %v787 = vsub.f32 1.5, %v786
  %v788 = vmul.f32 %v783, %v787
  %vm789 = vweird.f32 %v722
  %vm790 = vweird.f32 %v783
  %vm791 = vmor %vm789, %vm790
  %v792 = vsel %vm791, %v783, %v788
  %v793 = vrsqrt.pop %v723
  %v794 = vmul.f32 %v793, %v723
  %v795 = vmul.f32 %v794, %v793
  %v796 = vmul.f32 0.5, %v795
  %v797 = vsub.f32 1.5, %v796
  %v798 = vmul.f32 %v793, %v797
  %vm799 = vweird.f32 %v723
  %vm800 = vweird.f32 %v793
  %vm801 = vmor %vm799, %vm800
  %v802 = vsel %vm801, %v793, %v798
  %v803 = vrsqrt.pop %v724
  %v804 = vmul.f32 %v803, %v724
  %v805 = vmul.f32 %v804, %v803
  %v806 = vmul.f32 0.5, %v805
  %v807 = vsub.f32 1.5, %v806
  %v808 = vmul.f32 %v803, %v807
  %vm809 = vweird.f32 %v724
  %vm810 = vweird.f32 %v803
  %vm811 = vmor %vm809, %vm810
  %v812 = vsel %vm811, %v803, %v808
  %v813 = vrsqrt.pop %v725
  %v814 = vmul.f32 %v813, %v725
  %v815 = vmul.f32 %v814, %v813
  %v816 = vmul.f32 0.5, %v815
  %v817 = vsub.f32 1.5, %v816
  %v818 = vmul.f32 %v813, %v817
  %vm819 = vweird.f32 %v725
  %vm820 = vweird.f32 %v813
  %vm821 = vmor %vm819, %vm820
  %v822 = vsel %vm821, %v813, %v818
  %v823 = vrsqrt.pop %v726
  %v824 = vmul.f32 %v823, %v726
  %v825 = vmul.f32 %v824, %v823
  %v826 = vmul.f32 0.5, %v825
  %v827 = vsub.f32 1.5, %v826
  %v828 = vmul.f32 %v823, %v827
  %vm829 = vweird.f32 %v726
  %vm830 = vweird.f32 %v823
  %vm831 = vmor %vm829, %vm830
  %v832 = vsel %vm831, %v823, %v828
  %v833 = vrsqrt.pop %v727
  %v834 = vmul.f32 %v833, %v727
  %v835 = vmul.f32 %v834, %v833
  %v836 = vmul.f32 0.5, %v835
  %v837 = vsub.f32 1.5, %v836
  %v838 = vmul.f32 %v833, %v837
  %vm839 = vweird.f32 %v727
  %vm840 = vweird.f32 %v833
  %vm841 = vmor %vm839, %vm840
  %v842 = vsel %vm841, %v833, %v838
  %v843 = vrsqrt.pop %v728
  %v844 = vmul.f32 %v843, %v728
  %v845 = vmul.f32 %v844, %v843
  %v846 = vmul.f32 0.5, %v845
  %v847 = vsub.f32 1.5, %v846
  %v848 = vmul.f32 %v843, %v847
  %vm849 = vweird.f32 %v728
  %vm850 = vweird.f32 %v843
  %vm851 = vmor %vm849, %vm850
  %v852 = vsel %vm851, %v843, %v848
  %v853 = vrsqrt.pop %v729
  %v854 = vmul.f32 %v853, %v729
  %v855 = vmul.f32 %v854, %v853
  %v856 = vmul.f32 0.5, %v855
  %v857 = vsub.f32 1.5, %v856
  %v858 = vmul.f32 %v853, %v857
  %vm859 = vweird.f32 %v729
  %vm860 = vweird.f32 %v853
  %vm861 = vmor %vm859, %vm860
  %v862 = vsel %vm861, %v853, %v858
  %v863 = vrsqrt.pop %v730
  %v864 = vmul.f32 %v863, %v730
  %v865 = vmul.f32 %v864, %v863
  %v866 = vmul.f32 0.5, %v865
  %v867 = vsub.f32 1.5, %v866
  %v868 = vmul.f32 %v863, %v867
  %vm869 = vweird.f32 %v730
  %vm870 = vweird.f32 %v863
  %vm871 = vmor %vm869, %vm870
  %v872 = vsel %vm871, %v863, %v868
  %v873 = vrsqrt.pop %v731
  %v874 = vmul.f32 %v873, %v731
  %v875 = vmul.f32 %v874, %v873
  %v876 = vmul.f32 0.5, %v875
  %v877 = vsub.f32 1.5, %v876
  %v878 = vmul.f32 %v873, %v877
  %vm879 = vweird.f32 %v731
  %vm880 = vweird.f32 %v873
  %vm881 = vmor %vm879, %vm880
  %v882 = vsel %vm881, %v873, %v878
  %v883 = vrsqrt.pop %v732
  %v884 = vmul.f32 %v883, %v732
  %v885 = vmul.f32 %v884, %v883
  %v886 = vmul.f32 0.5, %v885
  %v887 = vsub.f32 1.5, %v886
  %v888 = vmul.f32 %v883, %v887
  %vm889 = vweird.f32 %v732
  %vm890 = vweird.f32 %v883
  %vm891 = vmor %vm889, %vm890
  %v892 = vsel %vm891, %v883, %v888
  %v893 = vld [vmem:[%s1] sm:$0xff]
  %v894 = vld [vmem:[%s1 + $0x8] sm:$0xff]
  %v895 = vld [vmem:[%s1 + $0x10] sm:$0xff]
  %v896 = vld [vmem:[%s1 + $0x18] sm:$0xff]
  %v897 = vld [vmem:[%s1 + $0x20] sm:$0xff]
  %v898 = vld [vmem:[%s1 + $0x28] sm:$0xff]
  %v899 = vld [vmem:[%s1 + $0x30] sm:$0xff]
  %v900 = vld [vmem:[%s1 + $0x38] sm:$0xff]
  %v901 = vld [vmem:[%s1 + $0x40] sm:$0xff]
  %v902 = vld [vmem:[%s1 + $0x48] sm:$0xff]
  %v903 = vld [vmem:[%s1 + $0x50] sm:$0xff]
  %v904 = vld [vmem:[%s1 + $0x58] sm:$0xff]
  %v905 = vld [vmem:[%s1 + $0x60] sm:$0xff]
  %v906 = vld [vmem:[%s1 + $0x68] sm:$0xff]
  %v907 = vld [vmem:[%s1 + $0x70] sm:$0xff]
  %v908 = vld [vmem:[%s1 + $0x78] sm:$0x3]
  %v909 = vmul.f32 %v893, %v742
  %v910 = vmul.f32 %v894, %v752
  %v911 = vmul.f32 %v895, %v762
  %v912 = vmul.f32 %v896, %v772
  %v913 = vmul.f32 %v897, %v782
  %v914 = vmul.f32 %v898, %v792
  %v915 = vmul.f32 %v899, %v802
  %v916 = vmul.f32 %v900, %v812
  %v917 = vmul.f32 %v901, %v822
  %v918 = vmul.f32 %v902, %v832
  %v919 = vmul.f32 %v903, %v842
  %v920 = vmul.f32 %v904, %v852
  %v921 = vmul.f32 %v905, %v862
  %v922 = vmul.f32 %v906, %v872
  %v923 = vmul.f32 %v907, %v882
  %v924 = vmul.f32 %v908, %v892
  %v925 = vld [vmem:[%s2] sm:$0xff]
  %v926 = vld [vmem:[%s2 + $0x8] sm:$0xff]
  %v927 = vld [vmem:[%s2 + $0x10] sm:$0xff]
  %v928 = vld [vmem:[%s2 + $0x18] sm:$0xff]
  %v929 = vld [vmem:[%s2 + $0x20] sm:$0xff]
  %v930 = vld [vmem:[%s2 + $0x28] sm:$0xff]
  %v931 = vld [vmem:[%s2 + $0x30] sm:$0xff]
  %v932 = vld [vmem:[%s2 + $0x38] sm:$0xff]
  %v933 = vld [vmem:[%s2 + $0x40] sm:$0xff]
  %v934 = vld [vmem:[%s2 + $0x48] sm:$0xff]
  %v935 = vld [vmem:[%s2 + $0x50] sm:$0xff]
  %v936 = vld [vmem:[%s2 + $0x58] sm:$0xff]
  %v937 = vld [vmem:[%s2 + $0x60] sm:$0xff]
  %v938 = vld [vmem:[%s2 + $0x68] sm:$0xff]
  %v939 = vld [vmem:[%s2 + $0x70] sm:$0xff]
  %v940 = vld [vmem:[%s2 + $0x78] sm:$0x3]
  %v941 = vmul.f32 %v295, %v909
  %v942 = vmul.f32 %v296, %v910
  %v943 = vmul.f32 %v297, %v911
  %v944 = vmul.f32 %v298, %v912
  %v945 = vmul.f32 %v299, %v913
  %v946 = vmul.f32 %v300, %v914
  %v947 = vmul.f32 %v301, %v915
  %v948 = vmul.f32 %v302, %v916
  %v949 = vmul.f32 %v303, %v917
  %v950 = vmul.f32 %v304, %v918
  %v951 = vmul.f32 %v305, %v919
  %v952 = vmul.f32 %v306, %v920
  %v953 = vmul.f32 %v307, %v921
  %v954 = vmul.f32 %v308, %v922
  %v955 = vmul.f32 %v309, %v923
  %v956 = vmul.f32 %v310, %v924
  %v957 = vsub.f32 %v925, %v941
  %v958 = vsub.f32 %v926, %v942
  %v959 = vsub.f32 %v927, %v943
  %v960 = vsub.f32 %v928, %v944
  %v961 = vsub.f32 %v929, %v945
  %v962 = vsub.f32 %v930, %v946
  %v963 = vsub.f32 %v931, %v947
  %v964 = vsub.f32 %v932, %v948
  %v965 = vsub.f32 %v933, %v949
  %v966 = vsub.f32 %v934, %v950
  %v967 = vsub.f32 %v935, %v951
  %v968 = vsub.f32 %v936, %v952
  %v969 = vsub.f32 %v937, %v953
  %v970 = vsub.f32 %v938, %v954
  %v971 = vsub.f32 %v939, %v955
  %v972 = vsub.f32 %v940, %v956
  %974 = vset.pattern.permute.xlu0 0
  %975 = vperm.xlu0 %974, %v909
  %v976 = vpop.permute.xlu0 %975
  %979 = vset.pattern.permute.xlu0 0
  %980 = vperm.xlu0 %979, %v910
  %v981 = vpop.permute.xlu0 %980
  %984 = vset.pattern.permute.xlu0 0
  %985 = vperm.xlu0 %984, %v911
  %v986 = vpop.permute.xlu0 %985
  %989 = vset.pattern.permute.xlu0 0
  %990 = vperm.xlu0 %989, %v912
  %v991 = vpop.permute.xlu0 %990
  %994 = vset.pattern.permute.xlu0 0
  %995 = vperm.xlu0 %994, %v913
  %v996 = vpop.permute.xlu0 %995
  %999 = vset.pattern.permute.xlu0 0
  %1000 = vperm.xlu0 %999, %v914
  %v1001 = vpop.permute.xlu0 %1000
  %1004 = vset.pattern.permute.xlu0 0
  %1005 = vperm.xlu0 %1004, %v915
  %v1006 = vpop.permute.xlu0 %1005
  %1009 = vset.pattern.permute.xlu0 0
  %1010 = vperm.xlu0 %1009, %v916
  %v1011 = vpop.permute.xlu0 %1010
  %1014 = vset.pattern.permute.xlu0 0
  %1015 = vperm.xlu0 %1014, %v917
  %v1016 = vpop.permute.xlu0 %1015
  %1019 = vset.pattern.permute.xlu0 0
  %1020 = vperm.xlu0 %1019, %v918
  %v1021 = vpop.permute.xlu0 %1020
  %1024 = vset.pattern.permute.xlu0 0
  %1025 = vperm.xlu0 %1024, %v919
  %v1026 = vpop.permute.xlu0 %1025
  %1029 = vset.pattern.permute.xlu0 0
  %1030 = vperm.xlu0 %1029, %v920
  %v1031 = vpop.permute.xlu0 %1030
  %1034 = vset.pattern.permute.xlu0 0
  %1035 = vperm.xlu0 %1034, %v921
  %v1036 = vpop.permute.xlu0 %1035
  %1039 = vset.pattern.permute.xlu0 0
  %1040 = vperm.xlu0 %1039, %v922
  %v1041 = vpop.permute.xlu0 %1040
  %1044 = vset.pattern.permute.xlu0 0
  %1045 = vperm.xlu0 %1044, %v923
  %v1046 = vpop.permute.xlu0 %1045
  %1049 = vset.pattern.permute.xlu0 0
  %1050 = vperm.xlu0 %1049, %v924
  %v1051 = vpop.permute.xlu0 %1050
  %v1053 = vmul.f32 %v14, %v976
  %v1054 = vmul.f32 %v15, %v976
  %v1055 = vmul.f32 %v16, %v976
  %v1056 = vmul.f32 %v17, %v976
  %v1057 = vmul.f32 %v18, %v976
  %v1058 = vmul.f32 %v19, %v976
  %v1059 = vmul.f32 %v20, %v976
  %v1060 = vmul.f32 %v21, %v981
  %v1061 = vmul.f32 %v22, %v981
  %v1062 = vmul.f32 %v23, %v981
  %v1063 = vmul.f32 %v24, %v981
  %v1064 = vmul.f32 %v25, %v981
  %v1065 = vmul.f32 %v26, %v981
  %v1066 = vmul.f32 %v27, %v981
  %v1067 = vmul.f32 %v28, %v986
  %v1068 = vmul.f32 %v29, %v986
  %v1069 = vmul.f32 %v30, %v986
  %v1070 = vmul.f32 %v31, %v986
  %v1071 = vmul.f32 %v32, %v986
  %v1072 = vmul.f32 %v33, %v986
  %v1073 = vmul.f32 %v34, %v986
  %v1074 = vmul.f32 %v35, %v991
  %v1075 = vmul.f32 %v36, %v991
  %v1076 = vmul.f32 %v37, %v991
  %v1077 = vmul.f32 %v38, %v991
  %v1078 = vmul.f32 %v39, %v991
  %v1079 = vmul.f32 %v40, %v991
  %v1080 = vmul.f32 %v41, %v991
  %v1081 = vmul.f32 %v42, %v996
  %v1082 = vmul.f32 %v43, %v996
  %v1083 = vmul.f32 %v44, %v996
  %v1084 = vmul.f32 %v45, %v996
  %v1085 = vmul.f32 %v46, %v996
  %v1086 = vmul.f32 %v47, %v996
  %v1087 = vmul.f32 %v48, %v996
  %v1088 = vmul.f32 %v49, %v1001
  %v1089 = vmul.f32 %v50, %v1001
  %v1090 = vmul.f32 %v51, %v1001
  %v1091 = vmul.f32 %v52, %v1001
  %v1092 = vmul.f32 %v53, %v1001
  %v1093 = vmul.f32 %v54, %v1001
  %v1094 = vmul.f32 %v55, %v1001
  %v1095 = vmul.f32 %v56, %v1006
  %v1096 = vmul.f32 %v57, %v1006
  %v1097 = vmul.f32 %v58, %v1006
  %v1098 = vmul.f32 %v59, %v1006
  %v1099 = vmul.f32 %v60, %v1006
  %v1100 = vmul.f32 %v61, %v1006
  %v1101 = vmul.f32 %v62, %v1006
  %v1102 = vmul.f32 %v63, %v1011
  %v1103 = vmul.f32 %v64, %v1011
  %v1104 = vmul.f32 %v65, %v1011
  %v1105 = vmul.f32 %v66, %v1011
  %v1106 = vmul.f32 %v67, %v1011
  %v1107 = vmul.f32 %v68, %v1011
  %v1108 = vmul.f32 %v69, %v1011
  %v1109 = vmul.f32 %v70, %v1016
  %v1110 = vmul.f32 %v71, %v1016
  %v1111 = vmul.f32 %v72, %v1016
  %v1112 = vmul.f32 %v73, %v1016
  %v1113 = vmul.f32 %v74, %v1016
  %v1114 = vmul.f32 %v75, %v1016
  %v1115 = vmul.f32 %v76, %v1016
  %v1116 = vmul.f32 %v77, %v1021
  %v1117 = vmul.f32 %v78, %v1021
  %v1118 = vmul.f32 %v79, %v1021
  %v1119 = vmul.f32 %v80, %v1021
  %v1120 = vmul.f32 %v81, %v1021
  %v1121 = vmul.f32 %v82, %v1021
  %v1122 = vmul.f32 %v83, %v1021
  %v1123 = vmul.f32 %v84, %v1026
  %v1124 = vmul.f32 %v85, %v1026
  %v1125 = vmul.f32 %v86, %v1026
  %v1126 = vmul.f32 %v87, %v1026
  %v1127 = vmul.f32 %v88, %v1026
  %v1128 = vmul.f32 %v89, %v1026
  %v1129 = vmul.f32 %v90, %v1026
  %v1130 = vmul.f32 %v91, %v1031
  %v1131 = vmul.f32 %v92, %v1031
  %v1132 = vmul.f32 %v93, %v1031
  %v1133 = vmul.f32 %v94, %v1031
  %v1134 = vmul.f32 %v95, %v1031
  %v1135 = vmul.f32 %v96, %v1031
  %v1136 = vmul.f32 %v97, %v1031
  %v1137 = vmul.f32 %v98, %v1036
  %v1138 = vmul.f32 %v99, %v1036
  %v1139 = vmul.f32 %v100, %v1036
  %v1140 = vmul.f32 %v101, %v1036
  %v1141 = vmul.f32 %v102, %v1036
  %v1142 = vmul.f32 %v103, %v1036
  %v1143 = vmul.f32 %v104, %v1036
  %v1144 = vmul.f32 %v105, %v1041
  %v1145 = vmul.f32 %v106, %v1041
  %v1146 = vmul.f32 %v107, %v1041
  %v1147 = vmul.f32 %v108, %v1041
  %v1148 = vmul.f32 %v109, %v1041
  %v1149 = vmul.f32 %v110, %v1041
  %v1150 = vmul.f32 %v111, %v1041
  %v1151 = vmul.f32 %v112, %v1046
  %v1152 = vmul.f32 %v113, %v1046
  %v1153 = vmul.f32 %v114, %v1046
  %v1154 = vmul.f32 %v115, %v1046
  %v1155 = vmul.f32 %v116, %v1046
  %v1156 = vmul.f32 %v117, %v1046
  %v1157 = vmul.f32 %v118, %v1046
  %v1158 = vmul.f32 %v119, %v1051
  %v1159 = vmul.f32 %v120, %v1051
  %v1160 = vmul.f32 %v121, %v1051
  %v1161 = vmul.f32 %v122, %v1051
  %v1162 = vmul.f32 %v123, %v1051
  %v1163 = vmul.f32 %v124, %v1051
  %v1164 = vmul.f32 %v125, %v1051
  %1166 = vset.pattern.permute.xlu0 0
  %1167 = vperm.xlu0 %1166, %v957
  %v1168 = vpop.permute.xlu0 %1167
  %1171 = vset.pattern.permute.xlu0 0
  %1172 = vperm.xlu0 %1171, %v958
  %v1173 = vpop.permute.xlu0 %1172
  %1176 = vset.pattern.permute.xlu0 0
  %1177 = vperm.xlu0 %1176, %v959
  %v1178 = vpop.permute.xlu0 %1177
  %1181 = vset.pattern.permute.xlu0 0
  %1182 = vperm.xlu0 %1181, %v960
  %v1183 = vpop.permute.xlu0 %1182
  %1186 = vset.pattern.permute.xlu0 0
  %1187 = vperm.xlu0 %1186, %v961
  %v1188 = vpop.permute.xlu0 %1187
  %1191 = vset.pattern.permute.xlu0 0
  %1192 = vperm.xlu0 %1191, %v962
  %v1193 = vpop.permute.xlu0 %1192
  %1196 = vset.pattern.permute.xlu0 0
  %1197 = vperm.xlu0 %1196, %v963
  %v1198 = vpop.permute.xlu0 %1197
  %1201 = vset.pattern.permute.xlu0 0
  %1202 = vperm.xlu0 %1201, %v964
  %v1203 = vpop.permute.xlu0 %1202
  %1206 = vset.pattern.permute.xlu0 0
  %1207 = vperm.xlu0 %1206, %v965
  %v1208 = vpop.permute.xlu0 %1207
  %1211 = vset.pattern.permute.xlu0 0
  %1212 = vperm.xlu0 %1211, %v966
  %v1213 = vpop.permute.xlu0 %1212
  %1216 = vset.pattern.permute.xlu0 0
  %1217 = vperm.xlu0 %1216, %v967
  %v1218 = vpop.permute.xlu0 %1217
  %1221 = vset.pattern.permute.xlu0 0
  %1222 = vperm.xlu0 %1221, %v968
  %v1223 = vpop.permute.xlu0 %1222
  %1226 = vset.pattern.permute.xlu0 0
  %1227 = vperm.xlu0 %1226, %v969
  %v1228 = vpop.permute.xlu0 %1227
  %1231 = vset.pattern.permute.xlu0 0
  %1232 = vperm.xlu0 %1231, %v970
  %v1233 = vpop.permute.xlu0 %1232
  %1236 = vset.pattern.permute.xlu0 0
  %1237 = vperm.xlu0 %1236, %v971
  %v1238 = vpop.permute.xlu0 %1237
  %1241 = vset.pattern.permute.xlu0 0
  %1242 = vperm.xlu0 %1241, %v972
  %v1243 = vpop.permute.xlu0 %1242
  %v1245 = vadd.f32 %v1053, %v1168
  %v1246 = vadd.f32 %v1054, %v1168
  %v1247 = vadd.f32 %v1055, %v1168
  %v1248 = vadd.f32 %v1056, %v1168
  %v1249 = vadd.f32 %v1057, %v1168
  %v1250 = vadd.f32 %v1058, %v1168
  %v1251 = vadd.f32 %v1059, %v1168
  %v1252 = vadd.f32 %v1060, %v1173
  %v1253 = vadd.f32 %v1061, %v1173
  %v1254 = vadd.f32 %v1062, %v1173
  %v1255 = vadd.f32 %v1063, %v1173
  %v1256 = vadd.f32 %v1064, %v1173
  %v1257 = vadd.f32 %v1065, %v1173
  %v1258 = vadd.f32 %v1066, %v1173
  %v1259 = vadd.f32 %v1067, %v1178
  %v1260 = vadd.f32 %v1068, %v1178
  %v1261 = vadd.f32 %v1069, %v1178
  %v1262 = vadd.f32 %v1070, %v1178
  %v1263 = vadd.f32 %v1071, %v1178
  %v1264 = vadd.f32 %v1072, %v1178
  %v1265 = vadd.f32 %v1073, %v1178
  %v1266 = vadd.f32 %v1074, %v1183
  %v1267 = vadd.f32 %v1075, %v1183
  %v1268 = vadd.f32 %v1076, %v1183
  %v1269 = vadd.f32 %v1077, %v1183
  %v1270 = vadd.f32 %v1078, %v1183
  %v1271 = vadd.f32 %v1079, %v1183
  %v1272 = vadd.f32 %v1080, %v1183
  %v1273 = vadd.f32 %v1081, %v1188
  %v1274 = vadd.f32 %v1082, %v1188
  %v1275 = vadd.f32 %v1083, %v1188
  %v1276 = vadd.f32 %v1084, %v1188
  %v1277 = vadd.f32 %v1085, %v1188
  %v1278 = vadd.f32 %v1086, %v1188
  %v1279 = vadd.f32 %v1087, %v1188
  %v1280 = vadd.f32 %v1088, %v1193
  %v1281 = vadd.f32 %v1089, %v1193
  %v1282 = vadd.f32 %v1090, %v1193
  %v1283 = vadd.f32 %v1091, %v1193
  %v1284 = vadd.f32 %v1092, %v1193
  %v1285 = vadd.f32 %v1093, %v1193
  %v1286 = vadd.f32 %v1094, %v1193
  %v1287 = vadd.f32 %v1095, %v1198
  %v1288 = vadd.f32 %v1096, %v1198
  %v1289 = vadd.f32 %v1097, %v1198
  %v1290 = vadd.f32 %v1098, %v1198
  %v1291 = vadd.f32 %v1099, %v1198
  %v1292 = vadd.f32 %v1100, %v1198
  %v1293 = vadd.f32 %v1101, %v1198
  %v1294 = vadd.f32 %v1102, %v1203
  %v1295 = vadd.f32 %v1103, %v1203
  %v1296 = vadd.f32 %v1104, %v1203
  %v1297 = vadd.f32 %v1105, %v1203
  %v1298 = vadd.f32 %v1106, %v1203
  %v1299 = vadd.f32 %v1107, %v1203
  %v1300 = vadd.f32 %v1108, %v1203
  %v1301 = vadd.f32 %v1109, %v1208
  %v1302 = vadd.f32 %v1110, %v1208
  %v1303 = vadd.f32 %v1111, %v1208
  %v1304 = vadd.f32 %v1112, %v1208
  %v1305 = vadd.f32 %v1113, %v1208
  %v1306 = vadd.f32 %v1114, %v1208
  %v1307 = vadd.f32 %v1115, %v1208
  %v1308 = vadd.f32 %v1116, %v1213
  %v1309 = vadd.f32 %v1117, %v1213
  %v1310 = vadd.f32 %v1118, %v1213
  %v1311 = vadd.f32 %v1119, %v1213
  %v1312 = vadd.f32 %v1120, %v1213
  %v1313 = vadd.f32 %v1121, %v1213
  %v1314 = vadd.f32 %v1122, %v1213
  %v1315 = vadd.f32 %v1123, %v1218
  %v1316 = vadd.f32 %v1124, %v1218
  %v1317 = vadd.f32 %v1125, %v1218
  %v1318 = vadd.f32 %v1126, %v1218
  %v1319 = vadd.f32 %v1127, %v1218
  %v1320 = vadd.f32 %v1128, %v1218
  %v1321 = vadd.f32 %v1129, %v1218
  %v1322 = vadd.f32 %v1130, %v1223
  %v1323 = vadd.f32 %v1131, %v1223
  %v1324 = vadd.f32 %v1132, %v1223
  %v1325 = vadd.f32 %v1133, %v1223
  %v1326 = vadd.f32 %v1134, %v1223
  %v1327 = vadd.f32 %v1135, %v1223
  %v1328 = vadd.f32 %v1136, %v1223
  %v1329 = vadd.f32 %v1137, %v1228
  %v1330 = vadd.f32 %v1138, %v1228
  %v1331 = vadd.f32 %v1139, %v1228
  %v1332 = vadd.f32 %v1140, %v1228
  %v1333 = vadd.f32 %v1141, %v1228
  %v1334 = vadd.f32 %v1142, %v1228
  %v1335 = vadd.f32 %v1143, %v1228
  %v1336 = vadd.f32 %v1144, %v1233
  %v1337 = vadd.f32 %v1145, %v1233
  %v1338 = vadd.f32 %v1146, %v1233
  %v1339 = vadd.f32 %v1147, %v1233
  %v1340 = vadd.f32 %v1148, %v1233
  %v1341 = vadd.f32 %v1149, %v1233
  %v1342 = vadd.f32 %v1150, %v1233
  %v1343 = vadd.f32 %v1151, %v1238
  %v1344 = vadd.f32 %v1152, %v1238
  %v1345 = vadd.f32 %v1153, %v1238
  %v1346 = vadd.f32 %v1154, %v1238
  %v1347 = vadd.f32 %v1155, %v1238
  %v1348 = vadd.f32 %v1156, %v1238
  %v1349 = vadd.f32 %v1157, %v1238
  %v1350 = vadd.f32 %v1158, %v1243
  %v1351 = vadd.f32 %v1159, %v1243
  %v1352 = vadd.f32 %v1160, %v1243
  %v1353 = vadd.f32 %v1161, %v1243
  %v1354 = vadd.f32 %v1162, %v1243
  %v1355 = vadd.f32 %v1163, %v1243
  %v1356 = vadd.f32 %v1164, %v1243
  %1357 = vst [vmem:[%s3] sm:$0xff] %v1245
  %1358 = vst [vmem:[%s3 + $0x8] sm:$0xff] %v1246
  %1359 = vst [vmem:[%s3 + $0x10] sm:$0xff] %v1247
  %1360 = vst [vmem:[%s3 + $0x18] sm:$0xff] %v1248
  %1361 = vst [vmem:[%s3 + $0x20] sm:$0xff] %v1249
  %1362 = vst [vmem:[%s3 + $0x28] sm:$0xff] %v1250
  %1363 = vst.msk [vmem:[%s3 + $0x30] sm:$0xff] %vm131, %v1251
  %1364 = vst [vmem:[%s3 + $0x38] sm:$0xff] %v1252
  %1365 = vst [vmem:[%s3 + $0x40] sm:$0xff] %v1253
  %1366 = vst [vmem:[%s3 + $0x48] sm:$0xff] %v1254
  %1367 = vst [vmem:[%s3 + $0x50] sm:$0xff] %v1255
  %1368 = vst [vmem:[%s3 + $0x58] sm:$0xff] %v1256
  %1369 = vst [vmem:[%s3 + $0x60] sm:$0xff] %v1257
  %1370 = vst.msk [vmem:[%s3 + $0x68] sm:$0xff] %vm131, %v1258
  %1371 = vst [vmem:[%s3 + $0x70] sm:$0xff] %v1259
  %1372 = vst [vmem:[%s3 + $0x78] sm:$0xff] %v1260
  %1373 = vst [vmem:[%s3 + $0x80] sm:$0xff] %v1261
  %1374 = vst [vmem:[%s3 + $0x88] sm:$0xff] %v1262
  %1375 = vst [vmem:[%s3 + $0x90] sm:$0xff] %v1263
  %1376 = vst [vmem:[%s3 + $0x98] sm:$0xff] %v1264
  %1377 = vst.msk [vmem:[%s3 + $0xa0] sm:$0xff] %vm131, %v1265
  %1378 = vst [vmem:[%s3 + $0xa8] sm:$0xff] %v1266
  %1379 = vst [vmem:[%s3 + $0xb0] sm:$0xff] %v1267
  %1380 = vst [vmem:[%s3 + $0xb8] sm:$0xff] %v1268
  %1381 = vst [vmem:[%s3 + $0xc0] sm:$0xff] %v1269
  %1382 = vst [vmem:[%s3 + $0xc8] sm:$0xff] %v1270
  %1383 = vst [vmem:[%s3 + $0xd0] sm:$0xff] %v1271
  %1384 = vst.msk [vmem:[%s3 + $0xd8] sm:$0xff] %vm131, %v1272
  %1385 = vst [vmem:[%s3 + $0xe0] sm:$0xff] %v1273
  %1386 = vst [vmem:[%s3 + $0xe8] sm:$0xff] %v1274
  %1387 = vst [vmem:[%s3 + $0xf0] sm:$0xff] %v1275
  %1388 = vst [vmem:[%s3 + $0xf8] sm:$0xff] %v1276
  %1389 = vst [vmem:[%s3 + $0x100] sm:$0xff] %v1277
  %1390 = vst [vmem:[%s3 + $0x108] sm:$0xff] %v1278
  %1391 = vst.msk [vmem:[%s3 + $0x110] sm:$0xff] %vm131, %v1279
  %1392 = vst [vmem:[%s3 + $0x118] sm:$0xff] %v1280
  %1393 = vst [vmem:[%s3 + $0x120] sm:$0xff] %v1281
  %1394 = vst [vmem:[%s3 + $0x128] sm:$0xff] %v1282
  %1395 = vst [vmem:[%s3 + $0x130] sm:$0xff] %v1283
  %1396 = vst [vmem:[%s3 + $0x138] sm:$0xff] %v1284
  %1397 = vst [vmem:[%s3 + $0x140] sm:$0xff] %v1285
  %1398 = vst.msk [vmem:[%s3 + $0x148] sm:$0xff] %vm131, %v1286
  %1399 = vst [vmem:[%s3 + $0x150] sm:$0xff] %v1287
  %1400 = vst [vmem:[%s3 + $0x158] sm:$0xff] %v1288
  %1401 = vst [vmem:[%s3 + $0x160] sm:$0xff] %v1289
  %1402 = vst [vmem:[%s3 + $0x168] sm:$0xff] %v1290
  %1403 = vst [vmem:[%s3 + $0x170] sm:$0xff] %v1291
  %1404 = vst [vmem:[%s3 + $0x178] sm:$0xff] %v1292
  %1405 = vst.msk [vmem:[%s3 + $0x180] sm:$0xff] %vm131, %v1293
  %1406 = vst [vmem:[%s3 + $0x188] sm:$0xff] %v1294
  %1407 = vst [vmem:[%s3 + $0x190] sm:$0xff] %v1295
  %1408 = vst [vmem:[%s3 + $0x198] sm:$0xff] %v1296
  %1409 = vst [vmem:[%s3 + $0x1a0] sm:$0xff] %v1297
  %1410 = vst [vmem:[%s3 + $0x1a8] sm:$0xff] %v1298
  %1411 = vst [vmem:[%s3 + $0x1b0] sm:$0xff] %v1299
  %1412 = vst.msk [vmem:[%s3 + $0x1b8] sm:$0xff] %vm131, %v1300
  %1413 = vst [vmem:[%s3 + $0x1c0] sm:$0xff] %v1301
  %1414 = vst [vmem:[%s3 + $0x1c8] sm:$0xff] %v1302
  %1415 = vst [vmem:[%s3 + $0x1d0] sm:$0xff] %v1303
  %1416 = vst [vmem:[%s3 + $0x1d8] sm:$0xff] %v1304
  %1417 = vst [vmem:[%s3 + $0x1e0] sm:$0xff] %v1305
  %1418 = vst [vmem:[%s3 + $0x1e8] sm:$0xff] %v1306
  %1419 = vst.msk [vmem:[%s3 + $0x1f0] sm:$0xff] %vm131, %v1307
  %1420 = vst [vmem:[%s3 + $0x1f8] sm:$0xff] %v1308
  %1421 = vst [vmem:[%s3 + $0x200] sm:$0xff] %v1309
  %1422 = vst [vmem:[%s3 + $0x208] sm:$0xff] %v1310
  %1423 = vst [vmem:[%s3 + $0x210] sm:$0xff] %v1311
  %1424 = vst [vmem:[%s3 + $0x218] sm:$0xff] %v1312
  %1425 = vst [vmem:[%s3 + $0x220] sm:$0xff] %v1313
  %1426 = vst.msk [vmem:[%s3 + $0x228] sm:$0xff] %vm131, %v1314
  %1427 = vst [vmem:[%s3 + $0x230] sm:$0xff] %v1315
  %1428 = vst [vmem:[%s3 + $0x238] sm:$0xff] %v1316
  %1429 = vst [vmem:[%s3 + $0x240] sm:$0xff] %v1317
  %1430 = vst [vmem:[%s3 + $0x248] sm:$0xff] %v1318
  %1431 = vst [vmem:[%s3 + $0x250] sm:$0xff] %v1319
  %1432 = vst [vmem:[%s3 + $0x258] sm:$0xff] %v1320
  %1433 = vst.msk [vmem:[%s3 + $0x260] sm:$0xff] %vm131, %v1321
  %1434 = vst [vmem:[%s3 + $0x268] sm:$0xff] %v1322
  %1435 = vst [vmem:[%s3 + $0x270] sm:$0xff] %v1323
  %1436 = vst [vmem:[%s3 + $0x278] sm:$0xff] %v1324
  %1437 = vst [vmem:[%s3 + $0x280] sm:$0xff] %v1325
  %1438 = vst [vmem:[%s3 + $0x288] sm:$0xff] %v1326
  %1439 = vst [vmem:[%s3 + $0x290] sm:$0xff] %v1327
  %1440 = vst.msk [vmem:[%s3 + $0x298] sm:$0xff] %vm131, %v1328
  %1441 = vst [vmem:[%s3 + $0x2a0] sm:$0xff] %v1329
  %1442 = vst [vmem:[%s3 + $0x2a8] sm:$0xff] %v1330
  %1443 = vst [vmem:[%s3 + $0x2b0] sm:$0xff] %v1331
  %1444 = vst [vmem:[%s3 + $0x2b8] sm:$0xff] %v1332
  %1445 = vst [vmem:[%s3 + $0x2c0] sm:$0xff] %v1333
  %1446 = vst [vmem:[%s3 + $0x2c8] sm:$0xff] %v1334
  %1447 = vst.msk [vmem:[%s3 + $0x2d0] sm:$0xff] %vm131, %v1335
  %1448 = vst [vmem:[%s3 + $0x2d8] sm:$0xff] %v1336
  %1449 = vst [vmem:[%s3 + $0x2e0] sm:$0xff] %v1337
  %1450 = vst [vmem:[%s3 + $0x2e8] sm:$0xff] %v1338
  %1451 = vst [vmem:[%s3 + $0x2f0] sm:$0xff] %v1339
  %1452 = vst [vmem:[%s3 + $0x2f8] sm:$0xff] %v1340
  %1453 = vst [vmem:[%s3 + $0x300] sm:$0xff] %v1341
  %1454 = vst.msk [vmem:[%s3 + $0x308] sm:$0xff] %vm131, %v1342
  %1455 = vst [vmem:[%s3 + $0x310] sm:$0xff] %v1343
  %1456 = vst [vmem:[%s3 + $0x318] sm:$0xff] %v1344
  %1457 = vst [vmem:[%s3 + $0x320] sm:$0xff] %v1345
  %1458 = vst [vmem:[%s3 + $0x328] sm:$0xff] %v1346
  %1459 = vst [vmem:[%s3 + $0x330] sm:$0xff] %v1347
  %1460 = vst [vmem:[%s3 + $0x338] sm:$0xff] %v1348
  %1461 = vst.msk [vmem:[%s3 + $0x340] sm:$0xff] %vm131, %v1349
  %1462 = vst [vmem:[%s3 + $0x348] sm:$0x3] %v1350
  %1463 = vst [vmem:[%s3 + $0x350] sm:$0x3] %v1351
  %1464 = vst [vmem:[%s3 + $0x358] sm:$0x3] %v1352
  %1465 = vst [vmem:[%s3 + $0x360] sm:$0x3] %v1353
  %1466 = vst [vmem:[%s3 + $0x368] sm:$0x3] %v1354
  %1467 = vst [vmem:[%s3 + $0x370] sm:$0x3] %v1355
  %1468 = vst.msk [vmem:[%s3 + $0x378] sm:$0x3] %vm274, %v1356
  // Predicated region
  $region14: #{tpu_custom_call.1} parent=0 // pred_check
    _
  $region15: #{tpu_custom_call.1} parent=0 // pred_check_branch
    %1470 = sbr.rel (0) target = $region17
  $region16: #{tpu_custom_call.1} parent=0 // pred_region
    _
  $region17: #{tpu_custom_call.1} parent=0 // pred_fallthru
    _
  // Predicated region
  $region18: #{tpu_custom_call.1} parent=0 // pred_check
    _
  $region19: #{tpu_custom_call.1} parent=0 // pred_check_branch
    %1472 = sbr.rel (0) target = $region21
  $region20: #{tpu_custom_call.1} parent=0 // pred_region
    _
  $region21: #{tpu_custom_call.1} parent=0 // pred_fallthru
    _

</llo_original>
